<compile_context>
chip_gen: v7x
topology: tpu7x:2x2x1
jax: 0.10.0
libtpu: 0.0.40
codegen_flags: <defaults>
</compile_context>

<pallas_src>
import functools

import jax
import jax.numpy as jnp
from jax import lax
from jax.experimental import pallas as pl
from jax.experimental.pallas import tpu as pltpu


# ----------------------------------------------------------------------------
# Kernel
# ----------------------------------------------------------------------------
def _make_depth2normal_kernel(BB, TH, W, H, image_size, max_depth, out_dtype,
                              use_halo):
    """depth (BB, TH, W) -> normals (BB, 3, TH, W), channels-first, lane-dense."""
    delta = 2.0 / float(image_size)          # NDC step between adjacent pixels
    bias = 0.5 * delta - 1.0                 # (idx + 0.5) * delta - 1 = idx*delta + bias
    max_depth_f = float(max_depth)           # plain Python float: no captured tracer

    def body(d_ref, halo_ref, out_ref):
        d_raw = d_ref[...]                                   # (BB, TH, W) f32
        unvalid = d_raw < 0.0
        d = jnp.where(unvalid, max_depth_f, d_raw)

        # Forward differences: only two in-plane shifts of the depth plane itself
        # (XLU rotates / slice+concat); wrapped rows/cols are border-masked below.
        d_right = jnp.roll(d, -1, axis=2)                    # d[i, j+1]
        d_down = jnp.roll(d, -1, axis=1)                     # d[i+1, j]

        row_l = lax.broadcasted_iota(jnp.int32, (BB, TH, W), 1)
        col_l = lax.broadcasted_iota(jnp.int32, (BB, TH, W), 2)

        if use_halo:
            # First row of the NEXT row-tile fixes the last local row of d_down.
            hrow = halo_ref[:, 0:1, :]                       # (BB, 1, W)
            hrow = jnp.where(hrow < 0.0, max_depth_f, hrow)
            d_down = jnp.where(row_l == TH - 1, hrow, d_down)
            row_g = row_l + pl.program_id(1) * TH            # global row index
        else:
            row_g = row_l

        ddx = d_right - d
        ddy = d_down - d

        # NDC grid generated in-kernel: X varies along rows, Y along columns.
        X = row_g.astype(jnp.float32) * delta + bias
        Y = col_l.astype(jnp.float32) * delta + bias

        # cross(vx, vy) with the affine NDC grid folded in algebraically; the
        # common positive factor `delta` cancels in the normalisation.
        nx = d_right * ddy
        ny = ddx * d_down
        nz = -(X * nx + Y * ny + delta * (d_right * d_down))

        # rsqrt + epsilon instead of norm + divide (degenerate normals -> 0.5
        # mid-gray instead of the reference's NaN; deliberate, benign).
        inv_norm = lax.rsqrt(nx * nx + ny * ny + nz * nz + 1e-20)

        # 1-pixel border + invalid-depth mask folded multiplicatively:
        #   c = 0.5 * keep ;  g = c - n * (c * inv_norm)
        keep = ((row_g >= 1) & (row_g <= H - 2)
                & (col_l >= 1) & (col_l <= W - 2)
                & jnp.logical_not(unvalid))
        c = jnp.where(keep, 0.5, 0.0)
        s = c * inv_norm

        out_ref[:, 0, :, :] = (c - nx * s).astype(out_dtype)
        out_ref[:, 1, :, :] = (c - ny * s).astype(out_dtype)
        out_ref[:, 2, :, :] = (c - nz * s).astype(out_dtype)

    if use_halo:
        def kernel(d_ref, halo_ref, out_ref):
            body(d_ref, halo_ref, out_ref)
    else:
        def kernel(d_ref, out_ref):
            body(d_ref, None, out_ref)
    return kernel


# ----------------------------------------------------------------------------
# Tiling plan
# ----------------------------------------------------------------------------
def _vmem_plan():
    """Generation-aware per-step block budget + explicit VMEM limit."""
    try:
        phys = int(pltpu.get_tpu_info().vmem_capacity_bytes)
    except Exception:
        phys = 64 * 1024 * 1024              # assume the smallest (v7x) VMEM
    block_cap = phys // 8                    # single-buffered in+out bytes per step
    vmem_limit = 2 * block_cap + 16 * 1024 * 1024   # double-buffered + headroom
    return block_cap, vmem_limit


def _row_tile_divisors(H):
    return [t for t in range(8, H + 1, 8) if H % t == 0]


def _plan_tiling(B, H, W, out_itemsize):
    """Returns (BB, TH, nrt, use_halo, vmem_limit)."""
    block_cap, vmem_limit = _vmem_plan()
    # per image-row VMEM cost of one pipeline buffer: f32 depth in + 3-ch out
    row_bytes = W * 4 + 3 * W * out_itemsize
    max_rows = max(8, block_cap // row_bytes)

    if H <= max_rows:
        TH, nrt, use_halo = H, 1, False
        # Fold batch elements into one block, but keep >= 2 grid steps when B >= 2.
        BB = 1
        for d in range(1, B + 1):
            if B % d == 0 and d * H <= max_rows and (B // d >= 2 or B < 2):
                BB = max(BB, d)
    else:
        cands = [t for t in _row_tile_divisors(H) if t <= max_rows]
        TH = max(cands) if cands else 8      # NOTE: H = 8*prime degrades to TH=8
        nrt = H // TH
        use_halo = True
        BB = 1

    # v7x has 2 TensorCores: make sure the "parallel" grid has >= 2 steps when
    # the problem allows it (otherwise one core idles).
    if B * nrt == 1:
        sub = [t for t in _row_tile_divisors(H) if t < H]
        if sub:
            TH = max(sub)
            nrt = H // TH
            use_halo = True
            BB = 1
    return BB, TH, nrt, use_halo, vmem_limit


# ----------------------------------------------------------------------------
# Forward wrapper (jitted so the zbuf slice / silhouette slice stay fused)
# ----------------------------------------------------------------------------
def _renderer_forward(silhouette_ref, zbuf, *, max_depth=5.0,
                      out_dtype=jnp.bfloat16, channels_last=False):
    """Replicates Renderer.forward given the (external) renderer outputs.

    silhouette_ref : (B, H, W, 4) float32  -- silhouette_renderer output
    zbuf           : (B, H, W, K) float32  -- depth_renderer .zbuf
    out_dtype      : normals dtype (default bfloat16; math stays f32 in-kernel)
    channels_last  : False -> lane-dense (B, 3, H, W) straight from the kernel
                     True  -> (B, H, W, 3) PyTorch layout (extra HBM transpose pass)
    returns (normals_out, silhouette_out (B, H, W))
    """
    B, H, W, _ = silhouette_ref.shape
    assert H == W, "Renderer assumes square images (image_size x image_size)."
    assert H % 8 == 0, "image size must be a multiple of 8 (TPU sublane tiling)."
    # Lane-dense store guard: production sizes should be a multiple of 128
    # (256/512/1024 are fine); tiny (<=128) test sizes are accepted.
    assert W % 128 == 0 or W <= 128, \
        "pad W to a multiple of 128 to keep stores lane-dense"
    image_size = H

    # glue: channel slices (matches silhouette_ref[..., 3] / zbuf[..., 0])
    silhouette_out = silhouette_ref[..., 3]
    if zbuf.shape[-1] == 1:
        depth = lax.squeeze(zbuf, (3,)).astype(jnp.float32)      # free under jit
    else:
        depth = zbuf[..., 0].astype(jnp.float32)                 # (B, H, W)

    out_isz = jnp.dtype(out_dtype).itemsize
    BB, TH, nrt, use_halo, vmem_limit = _plan_tiling(B, H, W, out_isz)

    kernel = _make_depth2normal_kernel(BB, TH, W, H, image_size, max_depth,
                                       out_dtype, use_halo)

    if use_halo:
        th8 = TH // 8
        max_hb = H // 8 - 1
        grid = (B // BB, nrt)
        in_specs = [
            # current depth row-tile
            pl.BlockSpec((BB, TH, W), lambda b, i: (b, i, 0)),
            # 8-row halo starting at the next tile (clamped on the last tile;
            # only feeds the last global row, which is border-masked to zero)
            pl.BlockSpec((BB, 8, W),
                         lambda b, i: (b, jnp.minimum((i + 1) * th8, max_hb), 0)),
        ]
        out_specs = pl.BlockSpec((BB, 3, TH, W), lambda b, i: (b, 0, i, 0))
        operands = (depth, depth)
    else:
        grid = (B // BB,)
        in_specs = [pl.BlockSpec((BB, H, W), lambda b: (b, 0, 0))]
        out_specs = pl.BlockSpec((BB, 3, H, W), lambda b: (b, 0, 0, 0))
        operands = (depth,)

    normals_cf = pl.pallas_call(
        kernel,
        out_shape=jax.ShapeDtypeStruct((B, 3, H, W), out_dtype),
        grid_spec=pltpu.PrefetchScalarGridSpec(
            num_scalar_prefetch=0,
            grid=grid,
            in_specs=in_specs,
            out_specs=out_specs),
        compiler_params=pltpu.CompilerParams(
            dimension_semantics=("parallel",) * len(grid),
            vmem_limit_bytes=int(vmem_limit)),
    )(*operands)

    if channels_last:
        # PyTorch (B, H, W, 3) convention; costs one extra HBM pass and a
        # lane-sparse minor dim -- prefer channels_last=False when possible.
        normals_out = jnp.transpose(normals_cf, (0, 2, 3, 1))
    else:
        normals_out = normals_cf
    return normals_out, silhouette_out


renderer_forward = jax.jit(
    _renderer_forward,
    static_argnames=("max_depth", "out_dtype", "channels_last"))


# ----------------------------------------------------------------------------
# Pure-JAX reference (mirrors depth_2_normal with the pinhole unprojection)
# ----------------------------------------------------------------------------
def _reference_normals(zbuf, max_depth):
    d = zbuf[..., 0].astype(jnp.float32)
    unvalid = d < 0.0
    d = jnp.where(unvalid, jnp.float32(max_depth), d)
    B, H, W = d.shape
    S = H
    ndc = 2.0 * (jnp.arange(S, dtype=jnp.float32) + 0.5) / S - 1.0
    X = jnp.broadcast_to(ndc[:, None], (H, W))
    Y = jnp.broadcast_to(ndc[None, :], (H, W))
    P = jnp.stack([X[None] * d, Y[None] * d, d], axis=-1)          # (B,H,W,3)
    vx = P[:, 1:-1, 2:, :] - P[:, 1:-1, 1:-1, :]
    vy = P[:, 2:, 1:-1, :] - P[:, 1:-1, 1:-1, :]
    n = jnp.cross(vx, vy)
    n = n / jnp.linalg.norm(n, axis=-1, keepdims=True)
    out = jnp.zeros((B, H, W, 3), jnp.float32)
    out = out.at[:, 1:-1, 1:-1, :].set(0.5 - 0.5 * n)
    out = jnp.where(unvalid[..., None], 0.0, out)
    return out


if __name__ == "__main__":
    key = jax.random.PRNGKey(0)
    B, H, W = 2, 16, 16

    k1, k2, k3 = jax.random.split(key, 3)
    # synthetic outputs of the external renderers
    silhouette_ref = jax.random.uniform(k1, (B, H, W, 4), dtype=jnp.float32)
    depth_vals = jax.random.uniform(k2, (B, H, W, 1), dtype=jnp.float32,
                                    minval=0.5, maxval=4.0)
    # mark some pixels as invalid (zbuf < 0), as a real rasterizer would
    invalid = jax.random.uniform(k3, (B, H, W, 1)) < 0.2
    zbuf = jnp.where(invalid, jnp.float32(-1.0), depth_vals)

    ref = _reference_normals(zbuf, 5.0)

    # default fast path: channels-first, bf16, grid = (2,) full-H blocks
    normals_cf, silhouette_out = renderer_forward(silhouette_ref, zbuf,
                                                  max_depth=5.0)
    jax.block_until_ready((normals_cf, silhouette_out))
    assert normals_cf.shape == (B, 3, H, W)
    assert normals_cf.dtype == jnp.bfloat16
    assert silhouette_out.shape == (B, H, W)
    err_bf16 = float(jnp.max(jnp.abs(
        jnp.transpose(normals_cf.astype(jnp.float32), (0, 2, 3, 1)) - ref)))
    assert err_bf16 < 2e-2, f"bf16 mismatch vs reference: {err_bf16}"

    # PyTorch-layout f32 path (exact check)
    normals_cl, _ = renderer_forward(silhouette_ref, zbuf, max_depth=5.0,
                                     out_dtype=jnp.float32, channels_last=True)
    jax.block_until_ready(normals_cl)
    assert normals_cl.shape == (B, H, W, 3)
    assert bool(jnp.all(jnp.isfinite(normals_cl)))
    err_f32 = float(jnp.max(jnp.abs(normals_cl - ref)))
    assert err_f32 < 1e-3, f"f32 mismatch vs reference: {err_f32}"

    # B=1 exercises the row-tiled + halo path (grid (1, 2) -> both TensorCores)
    normals_b1, _ = renderer_forward(silhouette_ref[:1], zbuf[:1], max_depth=5.0,
                                     out_dtype=jnp.float32, channels_last=True)
    jax.block_until_ready(normals_b1)
    err_b1 = float(jnp.max(jnp.abs(normals_b1 - _reference_normals(zbuf[:1], 5.0))))
    assert err_b1 < 1e-3, f"tiled-path mismatch vs reference: {err_b1}"

    print("KERNEL_OK")
</pallas_src>

<mosaic_0001>
module attributes {stable_mosaic.version = 11 : i64} {
  func.func @kernel(%arg0: i32, %arg1: memref<1x16x16xf32, #tpu.memory_space<vmem>>, %arg2: memref<1x3x16x16xbf16, #tpu.memory_space<vmem>>) attributes {dimension_semantics = [#tpu.dimension_semantics<parallel>], iteration_bounds = array<i64: 2>, scalar_prefetch = 0 : i64, scratch_operands = 0 : i64, tpu.core_type = #tpu.core_type<tc>, window_params = [{transform_indices = @transform_0, window_bounds = array<i64: 1, 16, 16>}, {transform_indices = @transform_1, window_bounds = array<i64: 1, 3, 16, 16>}]} {
    %c0 = arith.constant 0 : index
    %c0_0 = arith.constant 0 : index
    %c0_1 = arith.constant 0 : index
    %0 = vector.load %arg1[%c0, %c0_0, %c0_1] : memref<1x16x16xf32, #tpu.memory_space<vmem>>, vector<1x16x16xf32>
    %cst = arith.constant 0.000000e+00 : f32
    %1 = vector.broadcast %cst : f32 to vector<1x16x16xf32>
    %2 = arith.cmpf olt, %0, %1 : vector<1x16x16xf32>
    %cst_2 = arith.constant 5.000000e+00 : f32
    %3 = vector.broadcast %cst_2 : f32 to vector<1x16x16xf32>
    %4 = arith.select %2, %3, %0 : vector<1x16x16xi1>, vector<1x16x16xf32>
    %5 = vector.extract_strided_slice %4 {offsets = [0, 0, 1], sizes = [1, 16, 15], strides = [1, 1, 1]} : vector<1x16x16xf32> to vector<1x16x15xf32>
    %6 = vector.extract_strided_slice %4 {offsets = [0, 0, 0], sizes = [1, 16, 1], strides = [1, 1, 1]} : vector<1x16x16xf32> to vector<1x16x1xf32>
    %7 = tpu.concatenate %5, %6 in 2 : vector<1x16x15xf32>, vector<1x16x1xf32> -> vector<1x16x16xf32>
    %8 = vector.extract_strided_slice %4 {offsets = [0, 1, 0], sizes = [1, 15, 16], strides = [1, 1, 1]} : vector<1x16x16xf32> to vector<1x15x16xf32>
    %9 = vector.extract_strided_slice %4 {offsets = [0, 0, 0], sizes = [1, 1, 16], strides = [1, 1, 1]} : vector<1x16x16xf32> to vector<1x1x16xf32>
    %10 = tpu.concatenate %8, %9 in 1 : vector<1x15x16xf32>, vector<1x1x16xf32> -> vector<1x16x16xf32>
    %11 = tpu.iota {dimensions = array<i32: 1>} : vector<1x16x16xi32>
    %12 = tpu.iota {dimensions = array<i32: 2>} : vector<1x16x16xi32>
    %13 = arith.subf %7, %4 : vector<1x16x16xf32>
    %14 = arith.subf %10, %4 : vector<1x16x16xf32>
    %15 = arith.sitofp %11 : vector<1x16x16xi32> to vector<1x16x16xf32>
    %cst_3 = arith.constant 1.250000e-01 : f32
    %16 = vector.broadcast %cst_3 : f32 to vector<1x16x16xf32>
    %17 = arith.mulf %15, %16 : vector<1x16x16xf32>
    %cst_4 = arith.constant -9.375000e-01 : f32
    %18 = vector.broadcast %cst_4 : f32 to vector<1x16x16xf32>
    %19 = arith.addf %17, %18 : vector<1x16x16xf32>
    %20 = arith.sitofp %12 : vector<1x16x16xi32> to vector<1x16x16xf32>
    %cst_5 = arith.constant 1.250000e-01 : f32
    %21 = vector.broadcast %cst_5 : f32 to vector<1x16x16xf32>
    %22 = arith.mulf %20, %21 : vector<1x16x16xf32>
    %cst_6 = arith.constant -9.375000e-01 : f32
    %23 = vector.broadcast %cst_6 : f32 to vector<1x16x16xf32>
    %24 = arith.addf %22, %23 : vector<1x16x16xf32>
    %25 = arith.mulf %7, %14 : vector<1x16x16xf32>
    %26 = arith.mulf %13, %10 : vector<1x16x16xf32>
    %27 = arith.mulf %19, %25 : vector<1x16x16xf32>
    %28 = arith.mulf %24, %26 : vector<1x16x16xf32>
    %29 = arith.addf %27, %28 : vector<1x16x16xf32>
    %30 = arith.mulf %7, %10 : vector<1x16x16xf32>
    %cst_7 = arith.constant 1.250000e-01 : f32
    %31 = vector.broadcast %cst_7 : f32 to vector<1x16x16xf32>
    %32 = arith.mulf %31, %30 : vector<1x16x16xf32>
    %33 = arith.addf %29, %32 : vector<1x16x16xf32>
    %cst_8 = arith.constant 0.000000e+00 : f32
    %34 = vector.broadcast %cst_8 : f32 to vector<1x16x16xf32>
    %35 = arith.subf %34, %33 : vector<1x16x16xf32>
    %36 = arith.mulf %25, %25 : vector<1x16x16xf32>
    %37 = arith.mulf %26, %26 : vector<1x16x16xf32>
    %38 = arith.addf %36, %37 : vector<1x16x16xf32>
    %39 = arith.mulf %35, %35 : vector<1x16x16xf32>
    %40 = arith.addf %38, %39 : vector<1x16x16xf32>
    %cst_9 = arith.constant 9.99999968E-21 : f32
    %41 = vector.broadcast %cst_9 : f32 to vector<1x16x16xf32>
    %42 = arith.addf %40, %41 : vector<1x16x16xf32>
    %43 = math.rsqrt %42 : vector<1x16x16xf32>
    %c1_i32 = arith.constant 1 : i32
    %44 = vector.broadcast %c1_i32 : i32 to vector<1x16x16xi32>
    %45 = arith.cmpi sge, %11, %44 : vector<1x16x16xi32>
    %c14_i32 = arith.constant 14 : i32
    %46 = vector.broadcast %c14_i32 : i32 to vector<1x16x16xi32>
    %47 = arith.cmpi sle, %11, %46 : vector<1x16x16xi32>
    %48 = arith.andi %45, %47 : vector<1x16x16xi1>
    %c1_i32_10 = arith.constant 1 : i32
    %49 = vector.broadcast %c1_i32_10 : i32 to vector<1x16x16xi32>
    %50 = arith.cmpi sge, %12, %49 : vector<1x16x16xi32>
    %51 = arith.andi %48, %50 : vector<1x16x16xi1>
    %c14_i32_11 = arith.constant 14 : i32
    %52 = vector.broadcast %c14_i32_11 : i32 to vector<1x16x16xi32>
    %53 = arith.cmpi sle, %12, %52 : vector<1x16x16xi32>
    %54 = arith.andi %51, %53 : vector<1x16x16xi1>
    %cst_12 = arith.constant dense<true> : vector<1x16x16xi1>
    %55 = arith.xori %2, %cst_12 : vector<1x16x16xi1>
    %56 = arith.andi %54, %55 : vector<1x16x16xi1>
    %cst_13 = arith.constant 5.000000e-01 : f32
    %cst_14 = arith.constant 0.000000e+00 : f32
    %57 = vector.broadcast %cst_13 : f32 to vector<1x16x16xf32>
    %58 = vector.broadcast %cst_14 : f32 to vector<1x16x16xf32>
    %59 = arith.select %56, %57, %58 : vector<1x16x16xi1>, vector<1x16x16xf32>
    %60 = arith.mulf %59, %43 : vector<1x16x16xf32>
    %61 = arith.mulf %25, %60 : vector<1x16x16xf32>
    %62 = arith.subf %59, %61 : vector<1x16x16xf32>
    %63 = arith.truncf %62 : vector<1x16x16xf32> to vector<1x16x16xbf16>
    %c0_15 = arith.constant 0 : index
    %c0_16 = arith.constant 0 : index
    %c0_17 = arith.constant 0 : index
    %c0_18 = arith.constant 0 : index
    %64 = vector.load %arg2[%c0_15, %c0_16, %c0_17, %c0_18] : memref<1x3x16x16xbf16, #tpu.memory_space<vmem>>, vector<1x1x16x16xbf16>
    %65 = vector.shape_cast %64 : vector<1x1x16x16xbf16> to vector<1x16x16xbf16>
    %66 = vector.shape_cast %63 : vector<1x16x16xbf16> to vector<1x1x16x16xbf16>
    tpu.vector_store %arg2[%c0_15, %c0_16, %c0_17, %c0_18], %66 {strides = array<i32>} : memref<1x3x16x16xbf16, #tpu.memory_space<vmem>>, vector<1x1x16x16xbf16>,
    %67 = arith.mulf %26, %60 : vector<1x16x16xf32>
    %68 = arith.subf %59, %67 : vector<1x16x16xf32>
    %69 = arith.truncf %68 : vector<1x16x16xf32> to vector<1x16x16xbf16>
    %c0_19 = arith.constant 0 : index
    %c1 = arith.constant 1 : index
    %c0_20 = arith.constant 0 : index
    %c0_21 = arith.constant 0 : index
    %70 = vector.load %arg2[%c0_19, %c1, %c0_20, %c0_21] : memref<1x3x16x16xbf16, #tpu.memory_space<vmem>>, vector<1x1x16x16xbf16>
    %71 = vector.shape_cast %70 : vector<1x1x16x16xbf16> to vector<1x16x16xbf16>
    %72 = vector.shape_cast %69 : vector<1x16x16xbf16> to vector<1x1x16x16xbf16>
    tpu.vector_store %arg2[%c0_19, %c1, %c0_20, %c0_21], %72 {strides = array<i32>} : memref<1x3x16x16xbf16, #tpu.memory_space<vmem>>, vector<1x1x16x16xbf16>,
    %73 = arith.mulf %35, %60 : vector<1x16x16xf32>
    %74 = arith.subf %59, %73 : vector<1x16x16xf32>
    %75 = arith.truncf %74 : vector<1x16x16xf32> to vector<1x16x16xbf16>
    %c0_22 = arith.constant 0 : index
    %c2 = arith.constant 2 : index
    %c0_23 = arith.constant 0 : index
    %c0_24 = arith.constant 0 : index
    %76 = vector.load %arg2[%c0_22, %c2, %c0_23, %c0_24] : memref<1x3x16x16xbf16, #tpu.memory_space<vmem>>, vector<1x1x16x16xbf16>
    %77 = vector.shape_cast %76 : vector<1x1x16x16xbf16> to vector<1x16x16xbf16>
    %78 = vector.shape_cast %75 : vector<1x16x16xbf16> to vector<1x1x16x16xbf16>
    tpu.vector_store %arg2[%c0_22, %c2, %c0_23, %c0_24], %78 {strides = array<i32>} : memref<1x3x16x16xbf16, #tpu.memory_space<vmem>>, vector<1x1x16x16xbf16>,
    return
  }
  func.func @transform_0(%arg0: i32) -> (i32, i32, i32) {
    %c0_i32 = arith.constant 0 : i32
    %c0_i32_0 = arith.constant 0 : i32
    %c0_i32_1 = arith.constant 0 : i32
    return %arg0, %c0_i32, %c0_i32_0 : i32, i32, i32
  }
  func.func @transform_1(%arg0: i32) -> (i32, i32, i32, i32) {
    %c0_i32 = arith.constant 0 : i32
    %c0_i32_0 = arith.constant 0 : i32
    %c0_i32_1 = arith.constant 0 : i32
    %c0_i32_2 = arith.constant 0 : i32
    return %arg0, %c0_i32, %c0_i32_0, %c0_i32_1 : i32, i32, i32, i32
  }
}

</mosaic_0001>

<llo_original>
// kernel: _renderer_forward.1
$region0: #{_renderer_forward.1}
  #allocation0 [shape = 'u32[]', space=smem, size = 0x4, offset = 0x4, fixed_abs, tag = 'smem constant byte address 0x4 - core index']
  #allocation1 [shape = 'u32[144,128]{1,0:T(1,128)}', space=vmem, size = 0x12000, scoped, tag = 'internal scratch']
  %s0 = inlined_call_operand.vmem [shape: f32[2,16,16], index: 0, kind: input, shape index: {}]
  %s1 = inlined_call_operand.hbm [shape: bf16[2,3,16,16], index: 1, kind: output, shape index: {}]
  %s2 = sld [smem:[#allocation0]]
  $region37: #{_renderer_forward.1} parent=0
    _
  %s4 = ssub.s32 1, %s2
  %s5 = scalar_select 0, %s4, %s2
  $region1: #{_renderer_forward.1} parent=0
    #allocation2 [shape = 'u8[24576]{0}', space=vmem, size = 0x6000, scoped, tag = 'output window, operand 0']
    #allocation3 [shape = 's32[2]{0}', space=sflag, size = 0x8, scoped, tag = 'scoped memory for _renderer_forward.1']
    %6 = vsyncpa [#allocation3], 0
    %s7 = scalar_lea.sflag [#allocation3], 1
    %8 = vsyncpa %s7, 0
    loop: start=0, step=1, limit=4
    $region2: #{_renderer_forward.1} parent=1 // loop_pre_header
      _
    $region3: #{_renderer_forward.1} parent=1 // loop_header
      %s10 = sphi 0, %s14
      %p11 = scmp.ge.s32.totalorder %s10, 4
      %s20 = sphi 0, %s22
      %s23 = sphi 0, %s20
      %s24 = sphi 0, %s23
      %s40 = sphi 0, %s24
      %s46 = sphi 0, %s48
      %s49 = sphi 0, %s46
      %s50 = sphi 0, %s49
      %s66 = sphi 0, %s50
    $region4: #{_renderer_forward.1} parent=1 // loop_header_branch
      %13 = sbr.rel (%p11) target = $region8
    $region5: #{_renderer_forward.1} parent=1 // loop_body
      %s15 = ssub.s32 %s10, 1
      %s16 = ssub.s32 %s10, 2
      %s17 = sadd.s32 %s10, 1
      %s18 = ssub.s32 %s10, %s17
      %p19 = scmp.eq.s32.totalorder %s18, 0
      %s21 = sadd.s32 %s20, 1
      %s22 = scalar_select %p19, %s20, %s21
      %p25 = pneg %p19
      %p26 = scmp.eq.s32.totalorder %s10, 1
      %p27 = por %p25, %p26
      %p28 = scmp.ne.s32.totalorder %s20, %s23
      %p29 = scmp.eq.s32.totalorder %s10, 0
      %p30 = por %p28, %p29
      %p31 = scmp.ne.s32.totalorder %s20, %s23
      %p32 = scmp.eq.s32.totalorder %s15, 1
      %p33 = por %p31, %p32
      %p34 = scmp.ne.s32.totalorder %s23, %s24
      %p35 = scmp.eq.s32.totalorder %s15, 0
      %p36 = por %p34, %p35
      %p37 = scmp.ne.s32.totalorder %s23, %s24
      %p38 = scmp.eq.s32.totalorder %s16, 1
      %p39 = por %p37, %p38
      %p41 = scmp.ne.s32.totalorder %s24, %s40
      %p42 = scmp.eq.s32.totalorder %s16, 0
      %p43 = por %p41, %p42
      %s44 = ssub.s32 %s10, %s17
      %p45 = scmp.eq.s32.totalorder %s44, 0
      %s47 = sadd.s32 %s46, 1
      %s48 = scalar_select %p45, %s46, %s47
      %p51 = pneg %p45
      %p52 = scmp.eq.s32.totalorder %s10, 1
      %p53 = por %p51, %p52
      %p54 = scmp.ne.s32.totalorder %s46, %s49
      %p55 = scmp.eq.s32.totalorder %s10, 0
      %p56 = por %p54, %p55
      %p57 = scmp.ne.s32.totalorder %s46, %s49
      %p58 = scmp.eq.s32.totalorder %s15, 1
      %p59 = por %p57, %p58
      %p60 = scmp.ne.s32.totalorder %s49, %s50
      %p61 = scmp.eq.s32.totalorder %s15, 0
      %p62 = por %p60, %p61
      %p63 = scmp.ne.s32.totalorder %s49, %s50
      %p64 = scmp.eq.s32.totalorder %s16, 1
      %p65 = por %p63, %p64
      %p67 = scmp.ne.s32.totalorder %s50, %s66
      %p68 = scmp.eq.s32.totalorder %s16, 0
      %p69 = por %p67, %p68
      %p70 = scmp.le.s32.totalorder 1, %s10
      %p71 = scmp.lt.s32.totalorder %s10, 3
      %p72 = pnand %p70, %p71
      %p73 = pneg %p72
      // Predicated region
      $region9: #{_renderer_forward.1} parent=5 // pred_check
        _
      $region10: #{_renderer_forward.1} parent=5 // pred_check_branch
        %75 = sbr.rel (%p72) target = $region12
      $region11: #{_renderer_forward.1} parent=5 // pred_region
        %s76 = ssub.s32 %s10, 1
      $region12: #{_renderer_forward.1} parent=5 // pred_fallthru
        _
      %p77 = scmp.lt.s32.totalorder %s10, 2
      // Predicated region
      $region13: #{_renderer_forward.1} parent=5 // pred_check
        %p78 = pneg %p77
      $region14: #{_renderer_forward.1} parent=5 // pred_check_branch
        %80 = sbr.rel (%p78) target = $region16
      $region15: #{_renderer_forward.1} parent=5 // pred_region
        // Predicated region
        $region17: #{_renderer_forward.1} parent=15 // pred_check
          %p81 = pneg %p30
        $region18: #{_renderer_forward.1} parent=15 // pred_check_branch
          %83 = sbr.rel (%p81) target = $region20
        $region19: #{_renderer_forward.1} parent=15 // pred_region
          %p84 = scmp.lt.s32.totalorder %s10, 1
          %s85 = scalar_select %p84, %s10, 1
          %s86 = smul.addr %s85, 2
          %s87 = smul.addr %s86, 8
          %s88 = scalar_lea.vmem %s0, %s87
        $region20: #{_renderer_forward.1} parent=15 // pred_fallthru
          _
      $region16: #{_renderer_forward.1} parent=5 // pred_fallthru
        _
      %p89 = scmp.le.s32.totalorder 1, %s10
      %p90 = scmp.lt.s32.totalorder %s10, 3
      %p91 = pnand %p89, %p90
      %p92 = pneg %p91
      // Predicated region
      $region21: #{_renderer_forward.1} parent=5 // pred_check
        _
      $region22: #{_renderer_forward.1} parent=5 // pred_check_branch
        %94 = sbr.rel (%p91) target = $region24
      $region23: #{_renderer_forward.1} parent=5 // pred_region
        %s95 = ssub.s32 %s10, 1
        %p96 = scmp.lt.s32.totalorder %s15, 1
        %s97 = scalar_select %p96, %s15, 1
        %s98 = smul.addr %s97, 2
        %s99 = smul.addr %s98, 8
        %s100 = scalar_lea.vmem %s0, %s99
        %p101 = pneg %p36
        %p102 = pneg %p33
        %p103 = pneg %p62
        %p104 = pneg %p59
        %s105 = sand.u32 %s49, 1
        %s106 = scalar_lea.sflag [#allocation3], %s105
        %s107 = sand.u32 %s49, 1
        %s108 = smul.addr %s107, 24
        %s109 = scalar_lea.vmem [#allocation2], %s108
        %p110 = scmp.lt.s32.totalorder %s15, 1
        %s111 = scalar_select %p110, %s15, 1
        %s112 = smul.addr %s111, 2
        %s113 = smul.addr %s112, 8
        %s114 = scalar_lea.vmem %s0, %s113
        %v115 = vld [vmem:[%s114] sm:$0xff]
        %v116 = vld [vmem:[%s114 + $0x8] sm:$0xff]
        %vm117 = vcmp.lt.f32.partialorder %v115, 0.0
        %vm118 = vcmp.lt.f32.partialorder %v116, 0.0
        %v119 = vsel %vm117, 5.0, %v115
        %v120 = vsel %vm118, 5.0, %v116
        %123 = vrot.lane.b32.xlu0 %v119, 127
        %v124 = vpop.permute.xlu0 %123
        %125 = vrot.lane.b32.xlu0 %v120, 127
        %v126 = vpop.permute.xlu0 %125
        %129 = vrot.lane.b32.xlu0 %v119, 15
        %v130 = vpop.permute.xlu0 %129
        %131 = vrot.lane.b32.xlu0 %v120, 15
        %v132 = vpop.permute.xlu0 %131
        %vm135 = vcmask 121856
        %v136 = vsel %vm135, %v124, %v130
        %v137 = vsel %vm135, %v126, %v132
        %vm138 = vcmask 1046528
        %v139 = vrot.slane %v119, 1
        %v140 = vrot.slane %v120, 1
        %v141 = vsel %vm138, %v139, %v140
        %v145 = vsel %vm138, %v140, %v139
        %v146 = vlaneseq
        %v147 = vshrl.u32 %v146, 7
        %v148 = vadd.s32 %v147, 8
        %v149 = vlaneseq
        %v150 = vand.u32 %v149, 127
        %v151 = vsub.f32 %v136, %v119
        %v152 = vsub.f32 %v137, %v120
        %v153 = vsub.f32 %v141, %v119
        %v154 = vsub.f32 %v145, %v120
        %v155 = vcvt.s32.f32 %v147
        %v156 = vcvt.s32.f32 %v148
        %v157 = vmul.f32 %v155, 0.125
        %v158 = vmul.f32 %v156, 0.125
        %v159 = vadd.f32 %v157, -0.9375
        %v160 = vadd.f32 %v158, -0.9375
        %v161 = vcvt.s32.f32 %v150
        %v162 = vmul.f32 %v161, 0.125
        %v163 = vadd.f32 %v162, -0.9375
        %v164 = vmul.f32 %v136, %v153
        %v165 = vmul.f32 %v137, %v154
        %v166 = vmul.f32 %v151, %v141
        %v167 = vmul.f32 %v152, %v145
        %v168 = vmul.f32 %v159, %v164
        %v169 = vmul.f32 %v160, %v165
        %v170 = vmul.f32 %v163, %v166
        %v171 = vmul.f32 %v163, %v167
        %v172 = vadd.f32 %v168, %v170
        %v173 = vadd.f32 %v169, %v171
        %v174 = vmul.f32 %v136, %v141
        %v175 = vmul.f32 %v137, %v145
        %v176 = vmul.f32 %v174, 0.125
        %v177 = vmul.f32 %v175, 0.125
        %v178 = vadd.f32 %v172, %v176
        %v179 = vadd.f32 %v173, %v177
        %v180 = vsub.f32 0.0, %v178
        %v181 = vsub.f32 0.0, %v179
        %v182 = vmul.f32 %v164, %v164
        %v183 = vmul.f32 %v165, %v165
        %v184 = vmul.f32 %v166, %v166
        %v185 = vmul.f32 %v167, %v167
        %v186 = vadd.f32 %v182, %v184
        %v187 = vadd.f32 %v183, %v185
        %v188 = vmul.f32 %v180, %v180
        %v189 = vmul.f32 %v181, %v181
        %v190 = vadd.f32 %v186, %v188
        %v191 = vadd.f32 %v187, %v189
        %v192 = vadd.f32 %v190, 1e-20
        %v193 = vadd.f32 %v191, 1e-20
        %v194 = vrsqrt.pop %v192
        %v195 = vrsqrt.pop %v193
        %vm196 = vcmp.ge.s32.totalorder %v147, 1
        %vm197 = vcmp.ge.s32.totalorder %v148, 1
        %vm198 = vcmp.le.s32.totalorder %v147, 14
        %vm199 = vcmp.le.s32.totalorder %v148, 14
        %vm200 = vmand %vm196, %vm198
        %vm201 = vmand %vm197, %vm199
        %vm202 = vcmp.ge.s32.totalorder %v150, 1
        %vm203 = vmand %vm200, %vm202
        %vm204 = vmand %vm201, %vm202
        %vm205 = vcmp.le.s32.totalorder %v150, 14
        %vm206 = vmand %vm203, %vm205
        %vm207 = vmand %vm204, %vm205
        %vm208 = vmxor %vm117, 1
        %vm209 = vmxor %vm118, 1
        %vm210 = vmand %vm206, %vm208
        %vm211 = vmand %vm207, %vm209
        %v212 = vsel %vm210, 0.5, 0.0
        %v213 = vsel %vm211, 0.5, 0.0
        %v214 = vmul.f32 %v212, %v194
        %v215 = vmul.f32 %v213, %v195
        %v216 = vmul.f32 %v164, %v214
        %v217 = vmul.f32 %v165, %v215
        %v218 = vsub.f32 %v212, %v216
        %v219 = vsub.f32 %v213, %v217
        %v220 = vpack.c.bf16 %v219, %v218
        %v222 = vunpack.c.l.b16 %v220
        %v223 = vunpack.c.h.b16 %v220
        %v224 = vpack.c.b16 %v222, %v222
        %v225 = vpack.c.b16 %v223, %v223
        %vm228 = vcmask 125952
        %229 = vst.msk [vmem:[%s109] sm:$0xf] %vm228, %v224
        %230 = vst.msk [vmem:[%s109 + $0x4] sm:$0xf] %vm228, %v225
        %v231 = vmul.f32 %v166, %v214
        %v232 = vmul.f32 %v167, %v215
        %v233 = vsub.f32 %v212, %v231
        %v234 = vsub.f32 %v213, %v232
        %v235 = vpack.c.bf16 %v234, %v233
        %v237 = vunpack.c.l.b16 %v235
        %v238 = vunpack.c.h.b16 %v235
        %v239 = vpack.c.b16 %v237, %v237
        %v240 = vpack.c.b16 %v238, %v238
        %s243 = scalar_lea.vmem %s109, 8 [#allocation2]
        %244 = vst.msk [vmem:[%s243] sm:$0xf] %vm228, %v239
        %245 = vst.msk [vmem:[%s243 + $0x4] sm:$0xf] %vm228, %v240
        %v246 = vmul.f32 %v180, %v214
        %v247 = vmul.f32 %v181, %v215
        %v248 = vsub.f32 %v212, %v246
        %v249 = vsub.f32 %v213, %v247
        %v250 = vpack.c.bf16 %v249, %v248
        %v252 = vunpack.c.l.b16 %v250
        %v253 = vunpack.c.h.b16 %v250
        %v254 = vpack.c.b16 %v252, %v252
        %v255 = vpack.c.b16 %v253, %v253
        %s258 = scalar_lea.vmem %s109, 16 [#allocation2]
        %259 = vst.msk [vmem:[%s258] sm:$0xf] %vm228, %v254
        %260 = vst.msk [vmem:[%s258 + $0x4] sm:$0xf] %vm228, %v255
        %s261 = sand.u32 %s49, 1
        %s262 = scalar_lea.sflag [#allocation3], %s261
        %s263 = sand.u32 %s49, 1
        %s264 = smul.addr %s263, 24
        %s265 = scalar_lea.vmem [#allocation2], %s264
        // Predicated region
        $region25: #{_renderer_forward.1} parent=23 // pred_check
          %p266 = pneg %p59
        $region26: #{_renderer_forward.1} parent=23 // pred_check_branch
          %268 = sbr.rel (%p266) target = $region28
        $region27: #{_renderer_forward.1} parent=23 // pred_region
          %s270 = ssub.s32 384, 384
          %271 = vsyncadd %s262, %s270
          %s272 = smul.addr %s15, 6
          %s273 = smul.addr %s272, 64
          %s274 = scalar_lea.hbm %s1, %s273
          %s275 = sshll.u32 %s265, 4
          %s276 = int_to_ptr.vmem [resolvable:$true] %s275
          %281 = dma.vmem_to_hbm [thread:$0]  %s276, 384, %s274, %s262, 64, 64, 4
        $region28: #{_renderer_forward.1} parent=23 // pred_fallthru
          _
      $region24: #{_renderer_forward.1} parent=5 // pred_fallthru
        _
      %p282 = scmp.le.s32.totalorder 2, %s10
      // Predicated region
      $region29: #{_renderer_forward.1} parent=5 // pred_check
        %p283 = pneg %p282
      $region30: #{_renderer_forward.1} parent=5 // pred_check_branch
        %285 = sbr.rel (%p283) target = $region32
      $region31: #{_renderer_forward.1} parent=5 // pred_region
        %s286 = ssub.s32 %s10, 2
        // Predicated region
        $region33: #{_renderer_forward.1} parent=31 // pred_check
          %p287 = pneg %p65
        $region34: #{_renderer_forward.1} parent=31 // pred_check_branch
          %289 = sbr.rel (%p287) target = $region36
        $region35: #{_renderer_forward.1} parent=31 // pred_region
          %s290 = sand.u32 %s50, 1
          %s291 = scalar_lea.sflag [#allocation3], %s290
          %s292 = sand.u32 %s50, 1
          %s293 = smul.addr %s292, 24
          %s294 = scalar_lea.vmem [#allocation2], %s293
          %295 = dma.done %s291, 384
        $region36: #{_renderer_forward.1} parent=31 // pred_fallthru
          _
      $region32: #{_renderer_forward.1} parent=5 // pred_fallthru
        _
    $region6: #{_renderer_forward.1} parent=1 // loop_footer
      %s14 = sadd.s32 1, %s10
    $region7: #{_renderer_forward.1} parent=1 // loop_footer_branch
      %9 = sbr.rel target = $region3
    $region8: #{_renderer_forward.1} parent=1 // loop_exit
      _
    %296 = vsyncpa [#allocation3], 1
    %s297 = scalar_lea.sflag [#allocation3], 1
    %298 = vsyncpa %s297, 1

</llo_original>
